<compile_context>
chip_gen: v7x
topology: tpu7x:2x2x1
jax: 0.10.0
libtpu: 0.0.40
codegen_flags: <defaults>
</compile_context>

<pallas_src>
import jax
import jax.numpy as jnp
from jax.experimental import pallas as pl
from jax.experimental.pallas import tpu as pltpu

IN_DIM = 256
HID_DIM = 32
OUT_DIM = 5


def _level_classifier_kernel(x_ref, w1_ref, b1_ref, w2_ref, b2_ref, o_ref):
    # x_ref:  [TILE_N, 256]   w1_ref: [256, 32]   b1_ref: [1, 32]
    # w2_ref: [32, 5]         b2_ref: [1, 5]      o_ref:  [TILE_N, 5]

    # Linear(256 -> 32): bf16 operands on the MXU, f32 accumulation.
    # In-register cast -> no extra HBM traffic, single-pass matmul.
    x = x_ref[...].astype(jnp.bfloat16)
    w1 = w1_ref[...].astype(jnp.bfloat16)
    h = jnp.dot(x, w1, preferred_element_type=jnp.float32) + b1_ref[...]

    # LeakyReLU(negative_slope=0.1)
    h = jnp.where(h >= 0.0, h, 0.1 * h)

    # Linear(32 -> 5), same bf16-in / f32-acc treatment.
    logits = jnp.dot(h.astype(jnp.bfloat16), w2_ref[...].astype(jnp.bfloat16),
                     preferred_element_type=jnp.float32) + b2_ref[...]

    # Numerically stable softmax over the last dim. Exact divide so every row
    # sums to 1 (matches nn.Softmax's normalization exactly).
    m = jnp.max(logits, axis=-1, keepdims=True)
    e = jnp.exp(logits - m)
    denom = jnp.sum(e, axis=-1, keepdims=True)
    o_ref[...] = (e / denom).astype(o_ref.dtype)


def level_classifier(fea, w1, b1, w2, b2, *, tile_n=2048):
    """fea: [N, 256] float32 -> [N, 5] float32 (softmax probabilities).

    tile_n: rows per grid step (batch tile). For mid-size N the tile is shrunk
            so the grid has >= 2 steps (both v7x TensorCores participate);
            otherwise forced to a multiple of 8 to satisfy (8,128) tiling.
    """
    n = fea.shape[0]

    if n <= 16:
        # Tiny batch: a single grid step; block == full extent is always legal.
        tile_n = n
    elif n <= tile_n:
        # Mid-size batch: split into at least 2 row tiles so the "parallel"
        # axis can be sharded across v7x's two TensorCores (no-op on v5e/v6e).
        tile_n = max(8, ((pl.cdiv(n, 2) + 7) // 8) * 8)
    else:
        # Streaming path: multiple of 8 rows for sublane tiling.
        tile_n = max(8, (tile_n // 8) * 8)

    grid = (pl.cdiv(n, tile_n),)

    b1_2d = b1.reshape(1, HID_DIM)
    b2_2d = b2.reshape(1, OUT_DIM)

    weight_bytes = (IN_DIM * HID_DIM + HID_DIM + HID_DIM * OUT_DIM + OUT_DIM) * 4
    cost = pl.CostEstimate(
        flops=2 * n * (IN_DIM * HID_DIM + HID_DIM * OUT_DIM),
        transcendentals=n * OUT_DIM,                       # exp per output element
        bytes_accessed=n * IN_DIM * 4 + n * OUT_DIM * 4 + weight_bytes,
    )

    return pl.pallas_call(
        _level_classifier_kernel,
        out_shape=jax.ShapeDtypeStruct((n, OUT_DIM), jnp.float32),
        grid=grid,
        in_specs=[
            # Streamed batch tile (double-buffered by the Pallas pipeline).
            pl.BlockSpec((tile_n, IN_DIM), lambda i: (i, 0)),
            # Weights / biases: same block every step -> VMEM-resident.
            pl.BlockSpec((IN_DIM, HID_DIM), lambda i: (0, 0)),
            pl.BlockSpec((1, HID_DIM), lambda i: (0, 0)),
            pl.BlockSpec((HID_DIM, OUT_DIM), lambda i: (0, 0)),
            pl.BlockSpec((1, OUT_DIM), lambda i: (0, 0)),
        ],
        out_specs=pl.BlockSpec((tile_n, OUT_DIM), lambda i: (i, 0)),
        compiler_params=pltpu.CompilerParams(
            # Rows are fully independent: parallel axis lets v7x's two
            # TensorCores split the row tiles (no-op on v5e/v6e).
            dimension_semantics=("parallel",)),
        cost_estimate=cost,
    )(fea, w1, b1_2d, w2, b2_2d)


def _init_params(key):
    """Deterministic PyTorch-style (Kaiming-uniform) init for the two Linears."""
    k1, k2, k3, k4 = jax.random.split(key, 4)
    bound1 = 1.0 / jnp.sqrt(IN_DIM)
    bound2 = 1.0 / jnp.sqrt(HID_DIM)
    w1 = jax.random.uniform(k1, (IN_DIM, HID_DIM), jnp.float32, -bound1, bound1)
    b1 = jax.random.uniform(k2, (HID_DIM,), jnp.float32, -bound1, bound1)
    w2 = jax.random.uniform(k3, (HID_DIM, OUT_DIM), jnp.float32, -bound2, bound2)
    b2 = jax.random.uniform(k4, (OUT_DIM,), jnp.float32, -bound2, bound2)
    return w1, b1, w2, b2


def _reference(fea, w1, b1, w2, b2):
    h = fea @ w1 + b1
    h = jnp.where(h >= 0.0, h, 0.1 * h)
    logits = h @ w2 + b2
    return jax.nn.softmax(logits, axis=-1)


if __name__ == "__main__":
    key = jax.random.PRNGKey(0)
    k_x, k_x2, k_p = jax.random.split(key, 3)

    w1, b1, w2, b2 = _init_params(k_p)

    # bf16 MXU operands (f32 accumulation) -> small deviation from the fp32
    # PyTorch numerics; 5e-3 on softmax probabilities is ample headroom.
    ATOL = 5e-3

    # Small batch (single-tile path), matching the module's natural usage.
    N = 8
    fea = jax.random.normal(k_x, (N, IN_DIM), dtype=jnp.float32)
    out = jax.block_until_ready(level_classifier(fea, w1, b1, w2, b2))
    ref = _reference(fea, w1, b1, w2, b2)
    assert out.shape == (N, OUT_DIM)
    assert jnp.allclose(out, ref, atol=ATOL, rtol=ATOL), "mismatch vs reference (small)"
    assert jnp.allclose(jnp.sum(out, axis=-1), 1.0, atol=1e-4), "rows must sum to ~1"

    # Mid-size batch: the wrapper splits it into >= 2 row tiles (megacore path)
    # with a ragged last tile. Rows are independent, so valid rows stay exact.
    N2 = 300
    fea2 = jax.random.normal(k_x2, (N2, IN_DIM), dtype=jnp.float32)
    out2 = jax.block_until_ready(level_classifier(fea2, w1, b1, w2, b2))
    ref2 = _reference(fea2, w1, b1, w2, b2)
    assert out2.shape == (N2, OUT_DIM)
    assert jnp.allclose(out2, ref2, atol=ATOL, rtol=ATOL), "mismatch vs reference (mid)"
    assert jnp.allclose(jnp.sum(out2, axis=-1), 1.0, atol=1e-4), "rows must sum to ~1 (mid)"

    # Streaming path: explicit small tile so N > tile_n (5 grid steps, ragged tail).
    out3 = jax.block_until_ready(
        level_classifier(fea2, w1, b1, w2, b2, tile_n=64))
    assert out3.shape == (N2, OUT_DIM)
    assert jnp.allclose(out3, ref2, atol=ATOL, rtol=ATOL), "mismatch vs reference (tiled)"
    assert jnp.allclose(jnp.sum(out3, axis=-1), 1.0, atol=1e-4), "rows must sum to ~1 (tiled)"

    print("KERNEL_OK")
</pallas_src>

<mosaic_0001>
module attributes {stable_mosaic.version = 11 : i64} {
  func.func @_level_classifier_kernel(%arg0: i32, %arg1: memref<8x256xf32, #tpu.memory_space<vmem>>, %arg2: memref<256x32xf32, #tpu.memory_space<vmem>>, %arg3: memref<1x32xf32, #tpu.memory_space<vmem>>, %arg4: memref<32x5xf32, #tpu.memory_space<vmem>>, %arg5: memref<1x5xf32, #tpu.memory_space<vmem>>, %arg6: memref<8x5xf32, #tpu.memory_space<vmem>>) attributes {dimension_semantics = [#tpu.dimension_semantics<parallel>], iteration_bounds = array<i64: 1>, scalar_prefetch = 0 : i64, scratch_operands = 0 : i64, tpu.core_type = #tpu.core_type<tc>, window_params = [{transform_indices = @transform_0, window_bounds = array<i64: 8, 256>}, {pipeline_mode = #tpu.pipeline_mode<synchronous>, transform_indices = @transform_1, window_bounds = array<i64: 256, 32>}, {pipeline_mode = #tpu.pipeline_mode<synchronous>, transform_indices = @transform_2, window_bounds = array<i64: 1, 32>}, {pipeline_mode = #tpu.pipeline_mode<synchronous>, transform_indices = @transform_3, window_bounds = array<i64: 32, 5>}, {pipeline_mode = #tpu.pipeline_mode<synchronous>, transform_indices = @transform_4, window_bounds = array<i64: 1, 5>}, {transform_indices = @transform_5, window_bounds = array<i64: 8, 5>}]} {
    %c0 = arith.constant 0 : index
    %c0_0 = arith.constant 0 : index
    %0 = vector.load %arg1[%c0, %c0_0] : memref<8x256xf32, #tpu.memory_space<vmem>>, vector<8x256xf32>
    %1 = arith.truncf %0 : vector<8x256xf32> to vector<8x256xbf16>
    %c0_1 = arith.constant 0 : index
    %c0_2 = arith.constant 0 : index
    %2 = vector.load %arg2[%c0_1, %c0_2] : memref<256x32xf32, #tpu.memory_space<vmem>>, vector<256x32xf32>
    %3 = arith.truncf %2 : vector<256x32xf32> to vector<256x32xbf16>
    %cst = arith.constant dense<0.000000e+00> : vector<8x32xf32>
    %4 = tpu.matmul %1, %3, %cst {dimension_numbers = #tpu.dot_dimension_numbers<[1], [0], [0], [1], [0, 0, 1, 1], [], []>} : vector<8x256xbf16>, vector<256x32xbf16>, vector<8x32xf32> -> vector<8x32xf32>
    %c0_3 = arith.constant 0 : index
    %c0_4 = arith.constant 0 : index
    %5 = vector.load %arg3[%c0_3, %c0_4] : memref<1x32xf32, #tpu.memory_space<vmem>>, vector<1x32xf32>
    %6 = vector.broadcast %5 : vector<1x32xf32> to vector<8x32xf32>
    %7 = arith.addf %4, %6 : vector<8x32xf32>
    %cst_5 = arith.constant 0.000000e+00 : f32
    %8 = vector.broadcast %cst_5 : f32 to vector<8x32xf32>
    %9 = arith.cmpf oge, %7, %8 : vector<8x32xf32>
    %cst_6 = arith.constant 1.000000e-01 : f32
    %10 = vector.broadcast %cst_6 : f32 to vector<8x32xf32>
    %11 = arith.mulf %10, %7 : vector<8x32xf32>
    %12 = arith.select %9, %7, %11 : vector<8x32xi1>, vector<8x32xf32>
    %13 = arith.truncf %12 : vector<8x32xf32> to vector<8x32xbf16>
    %c0_7 = arith.constant 0 : index
    %c0_8 = arith.constant 0 : index
    %14 = vector.load %arg4[%c0_7, %c0_8] : memref<32x5xf32, #tpu.memory_space<vmem>>, vector<32x5xf32>
    %15 = arith.truncf %14 : vector<32x5xf32> to vector<32x5xbf16>
    %cst_9 = arith.constant dense<0.000000e+00> : vector<8x5xf32>
    %16 = tpu.matmul %13, %15, %cst_9 {dimension_numbers = #tpu.dot_dimension_numbers<[1], [0], [0], [1], [0, 0, 1, 1], [], []>} : vector<8x32xbf16>, vector<32x5xbf16>, vector<8x5xf32> -> vector<8x5xf32>
    %c0_10 = arith.constant 0 : index
    %c0_11 = arith.constant 0 : index
    %17 = vector.load %arg5[%c0_10, %c0_11] : memref<1x5xf32, #tpu.memory_space<vmem>>, vector<1x5xf32>
    %18 = vector.broadcast %17 : vector<1x5xf32> to vector<8x5xf32>
    %19 = arith.addf %16, %18 : vector<8x5xf32>
    %cst_12 = arith.constant dense<0xFF800000> : vector<8xf32>
    %20 = vector.multi_reduction <maximumf>, %19, %cst_12 [1] : vector<8x5xf32> to vector<8xf32>
    %21 = vector.shape_cast %20 : vector<8xf32> to vector<8x1xf32>
    %22 = vector.broadcast %21 : vector<8x1xf32> to vector<8x5xf32>
    %23 = arith.subf %19, %22 : vector<8x5xf32>
    %24 = math.exp %23 : vector<8x5xf32>
    %cst_13 = arith.constant dense<0.000000e+00> : vector<8xf32>
    %25 = vector.multi_reduction <add>, %24, %cst_13 [1] : vector<8x5xf32> to vector<8xf32>
    %26 = vector.shape_cast %25 : vector<8xf32> to vector<8x1xf32>
    %27 = vector.broadcast %26 : vector<8x1xf32> to vector<8x5xf32>
    %28 = arith.divf %24, %27 : vector<8x5xf32>
    %c0_14 = arith.constant 0 : index
    %c0_15 = arith.constant 0 : index
    %29 = vector.load %arg6[%c0_14, %c0_15] : memref<8x5xf32, #tpu.memory_space<vmem>>, vector<8x5xf32>
    tpu.vector_store %arg6[%c0_14, %c0_15], %28 {strides = array<i32>} : memref<8x5xf32, #tpu.memory_space<vmem>>, vector<8x5xf32>,
    return
  }
  func.func @transform_0(%arg0: i32) -> (i32, i32) {
    %c0_i32 = arith.constant 0 : i32
    %c0_i32_0 = arith.constant 0 : i32
    return %arg0, %c0_i32 : i32, i32
  }
  func.func @transform_1(%arg0: i32) -> (i32, i32) {
    %c0_i32 = arith.constant 0 : i32
    %c0_i32_0 = arith.constant 0 : i32
    %c0_i32_1 = arith.constant 0 : i32
    return %c0_i32, %c0_i32_0 : i32, i32
  }
  func.func @transform_2(%arg0: i32) -> (i32, i32) {
    %c0_i32 = arith.constant 0 : i32
    %c0_i32_0 = arith.constant 0 : i32
    %c0_i32_1 = arith.constant 0 : i32
    return %c0_i32, %c0_i32_0 : i32, i32
  }
  func.func @transform_3(%arg0: i32) -> (i32, i32) {
    %c0_i32 = arith.constant 0 : i32
    %c0_i32_0 = arith.constant 0 : i32
    %c0_i32_1 = arith.constant 0 : i32
    return %c0_i32, %c0_i32_0 : i32, i32
  }
  func.func @transform_4(%arg0: i32) -> (i32, i32) {
    %c0_i32 = arith.constant 0 : i32
    %c0_i32_0 = arith.constant 0 : i32
    %c0_i32_1 = arith.constant 0 : i32
    return %c0_i32, %c0_i32_0 : i32, i32
  }
  func.func @transform_5(%arg0: i32) -> (i32, i32) {
    %c0_i32 = arith.constant 0 : i32
    %c0_i32_0 = arith.constant 0 : i32
    return %arg0, %c0_i32 : i32, i32
  }
}

</mosaic_0001>

<llo_original>
// kernel: tpu_custom_call.1
$region0: #{tpu_custom_call.1}
  #allocation0 [shape = 'u32[]', space=smem, size = 0x4, offset = 0x4, fixed_abs, tag = 'smem constant byte address 0x4 - core index']
  #allocation1 [shape = 'u32[144,128]{1,0:T(1,128)}', space=vmem, size = 0x12000, scoped, tag = 'internal scratch']
  %s0 = inlined_call_operand.vmem [shape: f32[8,256], index: 0, kind: input, shape index: {}]
  %s1 = inlined_call_operand.vmem [shape: f32[256,32], index: 1, kind: input, shape index: {}]
  %s2 = inlined_call_operand.vmem [shape: f32[1,32], index: 2, kind: input, shape index: {}]
  %s3 = inlined_call_operand.vmem [shape: f32[32,5], index: 3, kind: input, shape index: {}]
  %s4 = inlined_call_operand.vmem [shape: f32[1,5], index: 4, kind: input, shape index: {}]
  %s5 = inlined_call_operand.hbm [shape: f32[8,5], index: 5, kind: output, shape index: {}]
  %s6 = sld [smem:[#allocation0]]
  $region30: #{tpu_custom_call.1} parent=0
    _
  %s8 = ssub.s32 1, %s6
  %s9 = scalar_select 0, %s8, %s6
  $region1: #{tpu_custom_call.1} parent=0
    #allocation2 [shape = 'u8[4096]{0}', space=vmem, size = 0x1000, scoped, tag = 'output window, operand 0, single buffered']
    #allocation3 [shape = 's32[1]{0}', space=sflag, size = 0x4, scoped, tag = 'scoped memory for tpu_custom_call.1']
    %10 = vsyncpa [#allocation3], 0
    // Predicated region
    $region2: #{tpu_custom_call.1} parent=1 // pred_check
      _
    $region3: #{tpu_custom_call.1} parent=1 // pred_check_branch
      %12 = sbr.rel (0) target = $region5
    $region4: #{tpu_custom_call.1} parent=1 // pred_region
      _
    $region5: #{tpu_custom_call.1} parent=1 // pred_fallthru
      _
    // Predicated region
    $region6: #{tpu_custom_call.1} parent=1 // pred_check
      _
    $region7: #{tpu_custom_call.1} parent=1 // pred_check_branch
      %14 = sbr.rel (0) target = $region9
    $region8: #{tpu_custom_call.1} parent=1 // pred_region
      _
    $region9: #{tpu_custom_call.1} parent=1 // pred_fallthru
      _
    // Predicated region
    $region10: #{tpu_custom_call.1} parent=1 // pred_check
      _
    $region11: #{tpu_custom_call.1} parent=1 // pred_check_branch
      %16 = sbr.rel (0) target = $region13
    $region12: #{tpu_custom_call.1} parent=1 // pred_region
      _
    $region13: #{tpu_custom_call.1} parent=1 // pred_fallthru
      _
    // Predicated region
    $region14: #{tpu_custom_call.1} parent=1 // pred_check
      _
    $region15: #{tpu_custom_call.1} parent=1 // pred_check_branch
      %18 = sbr.rel (0) target = $region17
    $region16: #{tpu_custom_call.1} parent=1 // pred_region
      _
    $region17: #{tpu_custom_call.1} parent=1 // pred_fallthru
      _
    // Predicated region
    $region18: #{tpu_custom_call.1} parent=1 // pred_check
      _
    $region19: #{tpu_custom_call.1} parent=1 // pred_check_branch
      %20 = sbr.rel (0) target = $region21
    $region20: #{tpu_custom_call.1} parent=1 // pred_region
      _
    $region21: #{tpu_custom_call.1} parent=1 // pred_fallthru
      _
    %v22 = vld [vmem:[%s0] sm:$0xff]
    %v23 = vld [vmem:[%s0 + $0x8] sm:$0xff]
    %v24 = vpack.c.bf16 %v22, %v22
    %v25 = vpack.c.bf16 %v23, %v23
    %v26 = vld [vmem:[%s1] sm:$0xff]
    %v27 = vld [vmem:[%s1 + $0x8] sm:$0xff]
    %v28 = vld [vmem:[%s1 + $0x10] sm:$0xff]
    %v29 = vld [vmem:[%s1 + $0x18] sm:$0xff]
    %v30 = vld [vmem:[%s1 + $0x20] sm:$0xff]
    %v31 = vld [vmem:[%s1 + $0x28] sm:$0xff]
    %v32 = vld [vmem:[%s1 + $0x30] sm:$0xff]
    %v33 = vld [vmem:[%s1 + $0x38] sm:$0xff]
    %v34 = vld [vmem:[%s1 + $0x40] sm:$0xff]
    %v35 = vld [vmem:[%s1 + $0x48] sm:$0xff]
    %v36 = vld [vmem:[%s1 + $0x50] sm:$0xff]
    %v37 = vld [vmem:[%s1 + $0x58] sm:$0xff]
    %v38 = vld [vmem:[%s1 + $0x60] sm:$0xff]
    %v39 = vld [vmem:[%s1 + $0x68] sm:$0xff]
    %v40 = vld [vmem:[%s1 + $0x70] sm:$0xff]
    %v41 = vld [vmem:[%s1 + $0x78] sm:$0xff]
    %v42 = vld [vmem:[%s1 + $0x80] sm:$0xff]
    %v43 = vld [vmem:[%s1 + $0x88] sm:$0xff]
    %v44 = vld [vmem:[%s1 + $0x90] sm:$0xff]
    %v45 = vld [vmem:[%s1 + $0x98] sm:$0xff]
    %v46 = vld [vmem:[%s1 + $0xa0] sm:$0xff]
    %v47 = vld [vmem:[%s1 + $0xa8] sm:$0xff]
    %v48 = vld [vmem:[%s1 + $0xb0] sm:$0xff]
    %v49 = vld [vmem:[%s1 + $0xb8] sm:$0xff]
    %v50 = vld [vmem:[%s1 + $0xc0] sm:$0xff]
    %v51 = vld [vmem:[%s1 + $0xc8] sm:$0xff]
    %v52 = vld [vmem:[%s1 + $0xd0] sm:$0xff]
    %v53 = vld [vmem:[%s1 + $0xd8] sm:$0xff]
    %v54 = vld [vmem:[%s1 + $0xe0] sm:$0xff]
    %v55 = vld [vmem:[%s1 + $0xe8] sm:$0xff]
    %v56 = vld [vmem:[%s1 + $0xf0] sm:$0xff]
    %v57 = vld [vmem:[%s1 + $0xf8] sm:$0xff]
    %v58 = vpack.c.bf16 %v27, %v26
    %v59 = vpack.c.bf16 %v29, %v28
    %v60 = vpack.c.bf16 %v31, %v30
    %v61 = vpack.c.bf16 %v33, %v32
    %v62 = vpack.c.bf16 %v35, %v34
    %v63 = vpack.c.bf16 %v37, %v36
    %v64 = vpack.c.bf16 %v39, %v38
    %v65 = vpack.c.bf16 %v41, %v40
    %v66 = vpack.c.bf16 %v43, %v42
    %v67 = vpack.c.bf16 %v45, %v44
    %v68 = vpack.c.bf16 %v47, %v46
    %v69 = vpack.c.bf16 %v49, %v48
    %v70 = vpack.c.bf16 %v51, %v50
    %v71 = vpack.c.bf16 %v53, %v52
    %v72 = vpack.c.bf16 %v55, %v54
    %v73 = vpack.c.bf16 %v57, %v56
    %v74 = vld [vmem:[%s2] sm:$0x1]
    %v76 = vlaneseq
    %v77 = vshrl.u32 %v76, 7
    %v78 = vsub.s32 0, %v77
    %v79 = vrot.slane %v74, %v78
    %81 = vmatprep.subr.bf16.mxu0 0
    %82 = vmatpush1.bf16.msra.mxu0 %v58
    %83 = vmatprep.subr.bf16.mxu0 0
    %84 = vmatpush1.bf16.msra.mxu0 %v59
    %85 = vmatprep.subr.bf16.mxu0 0
    %86 = vmatpush1.bf16.msra.mxu0 %v60
    %87 = vmatprep.subr.bf16.mxu0 0
    %88 = vmatpush1.bf16.msra.mxu0 %v61
    %89 = vmatprep.subr.bf16.mxu0 0
    %90 = vmatpush1.bf16.msra.mxu0 %v62
    %91 = vmatprep.subr.bf16.mxu0 0
    %92 = vmatpush1.bf16.msra.mxu0 %v63
    %93 = vmatprep.subr.bf16.mxu0 0
    %94 = vmatpush1.bf16.msra.mxu0 %v64
    %95 = vmatprep.subr.bf16.mxu0 0
    %96 = vmatpush1.bf16.msra.mxu0 %v65
    %97 = vmatprep.subr.bf16.mxu0 0
    %98 = vmatpush1.bf16.msra.mxu0 %v66
    %99 = vmatprep.subr.bf16.mxu0 0
    %100 = vmatpush1.bf16.msra.mxu0 %v67
    %101 = vmatprep.subr.bf16.mxu0 0
    %102 = vmatpush1.bf16.msra.mxu0 %v68
    %103 = vmatprep.subr.bf16.mxu0 0
    %104 = vmatpush1.bf16.msra.mxu0 %v69
    %105 = vmatprep.subr.bf16.mxu0 0
    %106 = vmatpush1.bf16.msra.mxu0 %v70
    %107 = vmatprep.subr.bf16.mxu0 0
    %108 = vmatpush1.bf16.msra.mxu0 %v71
    %109 = vmatprep.subr.bf16.mxu0 0
    %110 = vmatpush1.bf16.msra.mxu0 %v72
    %111 = vmatprep.subr.bf16.mxu0 0
    %112 = vmatpush1.bf16.msra.mxu0 %v73
    %113 = vmatprep.mubr.bf16.mxu0 %v25
    %114 = vmatmul.mubr.bf16.gmra.mrb[0].mxu0 %v24
    %v115 = vpop.f32.mrb[0].mxu0
    %v116 = vadd.f32 %v79, %v115
    %v117 = vpop.f32.mrb[0].mxu0
    %v118 = vpop.f32.mrb[0].mxu0
    %v119 = vpop.f32.mrb[0].mxu0
    %120 = vdwg.mxu0
    %vm121 = vcmp.ge.f32.partialorder %v116, 0.0
    %v122 = vmul.f32 %v116, 0.1
    %v123 = vsel %vm121, %v116, %v122
    %v124 = vpack.c.bf16 %v123, %v123
    %v125 = vld [vmem:[%s3] sm:$0xff]
    %v126 = vld [vmem:[%s3 + $0x8] sm:$0xff]
    %v127 = vld [vmem:[%s3 + $0x10] sm:$0xff]
    %v128 = vld [vmem:[%s3 + $0x18] sm:$0xff]
    %v129 = vpack.c.bf16 %v126, %v125
    %v130 = vpack.c.bf16 %v128, %v127
    %v131 = vld [vmem:[%s4] sm:$0x1]
    %v133 = vlaneseq
    %v134 = vshrl.u32 %v133, 7
    %v135 = vsub.s32 0, %v134
    %v136 = vrot.slane %v131, %v135
    %vm138 = vcmask 261120
    %v140 = vsel %vm138, %v124, 0
    %142 = vmatprep.subr.bf16.mxu0 0
    %143 = vmatpush1.bf16.msra.mxu0 %v129
    %144 = vmatprep.subr.bf16.mxu0 0
    %145 = vmatpush1.bf16.msra.mxu0 %v130
    %146 = vmatprep.subr.bf16.mxu0 0
    %147 = vmatpush1.bf16.msra.mxu0 0
    %148 = vmatprep.subr.bf16.mxu0 0
    %149 = vmatpush1.bf16.msra.mxu0 0
    %150 = vmatprep.subr.bf16.mxu0 0
    %151 = vmatpush1.bf16.msra.mxu0 0
    %152 = vmatprep.subr.bf16.mxu0 0
    %153 = vmatpush1.bf16.msra.mxu0 0
    %154 = vmatprep.subr.bf16.mxu0 0
    %155 = vmatpush1.bf16.msra.mxu0 0
    %156 = vmatprep.subr.bf16.mxu0 0
    %157 = vmatpush1.bf16.msra.mxu0 0
    %158 = vmatprep.subr.bf16.mxu0 0
    %159 = vmatpush1.bf16.msra.mxu0 0
    %160 = vmatprep.subr.bf16.mxu0 0
    %161 = vmatpush1.bf16.msra.mxu0 0
    %162 = vmatprep.subr.bf16.mxu0 0
    %163 = vmatpush1.bf16.msra.mxu0 0
    %164 = vmatprep.subr.bf16.mxu0 0
    %165 = vmatpush1.bf16.msra.mxu0 0
    %166 = vmatprep.subr.bf16.mxu0 0
    %167 = vmatpush1.bf16.msra.mxu0 0
    %168 = vmatprep.subr.bf16.mxu0 0
    %169 = vmatpush1.bf16.msra.mxu0 0
    %170 = vmatprep.subr.bf16.mxu0 0
    %171 = vmatpush1.bf16.msra.mxu0 0
    %172 = vmatprep.subr.bf16.mxu0 0
    %173 = vmatpush1.bf16.msra.mxu0 0
    %174 = vmatprep.mubr.bf16.mxu0 0
    %175 = vmatmul.mubr.bf16.gmra.mrb[0].mxu0 %v140
    %v176 = vpop.f32.mrb[0].mxu0
    %v177 = vadd.f32 %v136, %v176
    %v178 = vpop.f32.mrb[0].mxu0
    %v179 = vpop.f32.mrb[0].mxu0
    %v180 = vpop.f32.mrb[0].mxu0
    %181 = vdwg.mxu0
    %vm182 = vcmask 39936
    %v183 = vsel %vm182, %v177, -inf
    %184 = vmax.xlane.f32.xlu0 %v183
    %v185 = vpop.xlane.xlu0 %184
    %v186 = vsub.f32 %v177, %v185
    %v187 = vmul.f32 %v186, 1.442695
    %v188 = vpow.pop %v187
    %v189 = vsel %vm182, %v188, 0.0
    %190 = vadd.xlane.f32.xlu0 %v189
    %v191 = vpop.xlane.xlu0 %190
    %v192 = vrcp.pop %v191
    %v193 = vmul.f32 %v188, %v192
    %194 = vst.msk [vmem:[#allocation2] sm:$0xff] %vm182, %v193
    // Predicated region
    $region22: #{tpu_custom_call.1} parent=1 // pred_check
      _
    $region23: #{tpu_custom_call.1} parent=1 // pred_check_branch
      %196 = sbr.rel (0) target = $region25
    $region24: #{tpu_custom_call.1} parent=1 // pred_region
      %s198 = ssub.s32 128, 128
      %199 = vsyncadd [#allocation3], %s198
      %s201 = sshll.u32 [#allocation2], 4
      %s202 = int_to_ptr.vmem [resolvable:$true] %s201
      %204 = dma.vmem_to_hbm [thread:$0]  %s202, 128, %s5, [#allocation3]
    $region25: #{tpu_custom_call.1} parent=1 // pred_fallthru
      _
    // Predicated region
    $region26: #{tpu_custom_call.1} parent=1 // pred_check
      _
    $region27: #{tpu_custom_call.1} parent=1 // pred_check_branch
      %206 = sbr.rel (0) target = $region29
    $region28: #{tpu_custom_call.1} parent=1 // pred_region
      %207 = dma.done [#allocation3], 128
    $region29: #{tpu_custom_call.1} parent=1 // pred_fallthru
      _
    %208 = vsyncpa [#allocation3], 1

</llo_original>
